<compile_context>
chip_gen: v6e
topology: v6e:2x2x1
jax: 0.10.0
libtpu: 0.0.40
codegen_flags: <defaults>
</compile_context>

<pallas_src>
import jax
import jax.numpy as jnp
from jax.experimental import pallas as pl
from jax.experimental.pallas import tpu as pltpu

HID = 16      # hidden width of the MLP
LANE = 128    # lane-padded width used inside the kernel


def _round_up(x, m):
    return (x + m - 1) // m * m


def _discriminator_kernel(x_ref, w1_ref, b1_ref, w2_ref, b2_ref,
                          w3_ref, b3_ref, o_ref):
    # x arrives in its HBM dtype; cast the tile to the compute dtype here so
    # the wrapper never materializes (and the kernel never re-reads) a
    # converted copy of x.
    x = x_ref[...].astype(w1_ref.dtype)            # (TB, D)

    # Layer 1: Linear(D, 16) + LeakyReLU(0.01)   (lanes 16..127 are zero-pad)
    h1 = jnp.dot(x, w1_ref[...], preferred_element_type=jnp.float32) + b1_ref[...]
    h1 = jnp.where(h1 > 0, h1, 0.01 * h1)

    # Layer 2: Linear(16, 16) + LeakyReLU(0.01)
    h2 = jnp.dot(h1.astype(w2_ref.dtype), w2_ref[...],
                 preferred_element_type=jnp.float32) + b2_ref[...]
    h2 = jnp.where(h2 > 0, h2, 0.01 * h2)

    # Layer 3: Linear(16, 1)                      (real logit lives in lane 0)
    h3 = jnp.dot(h2.astype(w3_ref.dtype), w3_ref[...],
                 preferred_element_type=jnp.float32) + b3_ref[...]

    # Pack: move the per-row logit (lane 0) onto a single lane-dense row via a
    # transpose (XLU has slack), then apply sigmoid only to the packed row.
    logits = jnp.transpose(h3)[0:1, :]             # (1, TB)
    # sigmoid(x) = 1 / (1 + exp(-x)); exp on the EUP, exact reciprocal is free.
    o_ref[...] = pl.reciprocal(1.0 + jnp.exp(-logits), approx=False)


def _pad_params(params, compute_dtype):
    """Lane-pad (in,out) weights to width 128 so all layers are unmasked."""
    w1, b1 = params["w1"], params["b1"]
    w2, b2 = params["w2"], params["b2"]
    w3, b3 = params["w3"], params["b3"]
    d = w1.shape[0]

    w1p = jnp.zeros((d, LANE), compute_dtype).at[:, :HID].set(w1.astype(compute_dtype))
    w2p = jnp.zeros((LANE, LANE), compute_dtype).at[:HID, :HID].set(w2.astype(compute_dtype))
    w3p = jnp.zeros((LANE, LANE), compute_dtype).at[:HID, :1].set(w3.astype(compute_dtype))
    b1p = jnp.zeros((1, LANE), jnp.float32).at[0, :HID].set(b1.astype(jnp.float32))
    b2p = jnp.zeros((1, LANE), jnp.float32).at[0, :HID].set(b2.astype(jnp.float32))
    b3p = jnp.zeros((1, LANE), jnp.float32).at[0, :1].set(b3.astype(jnp.float32))
    return w1p, b1p, w2p, b2p, w3p, b3p


def discriminator_forward(inputs, params, *, block_b=2048,
                          compute_dtype=jnp.bfloat16):
    """inputs: (B, ...) any trailing shape; returns (B, 1) float32 in [0, 1]."""
    B = inputs.shape[0]
    x = inputs.reshape(B, -1)            # flatten all but batch; keep its dtype
    D = x.shape[1]

    x_item = jnp.dtype(x.dtype).itemsize
    w_item = jnp.dtype(compute_dtype).itemsize

    # ---- batch tile selection -----------------------------------------------
    # Multiple of 128 (keeps the packed output lane-dense), capped by block_b.
    TB = min(_round_up(int(block_b), LANE), _round_up(B, LANE))
    # Keep >= 2 grid steps for medium/large batches so "parallel" can shard the
    # batch across both v7x TensorCores.
    if B >= 2 * LANE:
        TB = min(TB, _round_up((B + 1) // 2, LANE))
    TB = max(TB, LANE)

    # VMEM budget: double-buffered x/out tiles, resident params, and the f32
    # intermediates (h1/h2/h3 + h3^T) plus the in-kernel bf16 copy of x.
    def vmem_needed(tb):
        return (2 * tb * D * x_item                              # x tiles (x2)
                + 2 * 1 * tb * 4                                 # packed out (x2)
                + 2 * (D * LANE + 2 * LANE * LANE) * w_item      # weights
                + 2 * 3 * LANE * 4                               # biases
                + tb * D * w_item                                # in-kernel x cast
                + 4 * tb * LANE * 4                              # h1/h2/h3 + h3^T
                + (4 << 20))                                     # scratch/headroom

    try:
        vmem_cap = int(pltpu.get_tpu_info().vmem_capacity_bytes)
    except Exception:
        vmem_cap = 64 << 20                      # conservative (v7x) fallback
    budget = max((vmem_cap * 3) // 4, 16 << 20)
    while TB > LANE and vmem_needed(TB) > budget:
        TB = max(LANE, ((TB // 2) // LANE) * LANE)
    vmem_limit = int(min(max(vmem_needed(TB), 16 << 20), budget))

    steps = pl.cdiv(B, TB)
    Bp = steps * TB

    # Only pad x when the whole batch is smaller than one tile (< TB rows, so
    # the copy is negligible). Ragged last tiles for larger batches rely on
    # Pallas' masked edge-block handling -- no extra HBM pass over x.
    if B < TB:
        x = jnp.pad(x, ((0, TB - B), (0, 0)))

    w1, b1, w2, b2, w3, b3 = _pad_params(params, compute_dtype)

    # Advisory cost estimate (real HBM traffic: x read + packed logits write).
    cost = pl.CostEstimate(
        flops=2 * Bp * (D * LANE + 2 * LANE * LANE),
        transcendentals=Bp,
        bytes_accessed=(Bp * D * x_item                          # x read
                        + Bp * 4                                 # packed output
                        + (D * LANE + 2 * LANE * LANE) * w_item  # weights
                        + 3 * LANE * 4))                         # biases

    out_packed = pl.pallas_call(
        _discriminator_kernel,
        out_shape=jax.ShapeDtypeStruct((1, Bp), jnp.float32),
        grid=(steps,),
        in_specs=[
            pl.BlockSpec((TB, D), lambda i: (i, 0)),        # x tile (pipelined)
            pl.BlockSpec((D, LANE), lambda i: (0, 0)),      # w1 (resident)
            pl.BlockSpec((1, LANE), lambda i: (0, 0)),      # b1
            pl.BlockSpec((LANE, LANE), lambda i: (0, 0)),   # w2
            pl.BlockSpec((1, LANE), lambda i: (0, 0)),      # b2
            pl.BlockSpec((LANE, LANE), lambda i: (0, 0)),   # w3
            pl.BlockSpec((1, LANE), lambda i: (0, 0)),      # b3
        ],
        out_specs=pl.BlockSpec((1, TB), lambda i: (0, i)),
        compiler_params=pltpu.CompilerParams(
            dimension_semantics=("parallel",),
            vmem_limit_bytes=vmem_limit),
        cost_estimate=cost,
    )(x, w1, b1, w2, b2, w3, b3)

    # Column b of the packed row is the sigmoid output for batch row b.
    return out_packed[0, :B].reshape(B, 1)


def init_params(key, output_size):
    """PyTorch nn.Linear default init U(-k, k), k = 1/sqrt(fan_in).
    Weights are stored (in, out) so each layer computes x @ W + b."""
    def linear(k, fan_in, fan_out):
        kw, kb = jax.random.split(k)
        bound = 1.0 / jnp.sqrt(float(fan_in))
        w = jax.random.uniform(kw, (fan_in, fan_out), jnp.float32, -bound, bound)
        b = jax.random.uniform(kb, (fan_out,), jnp.float32, -bound, bound)
        return w, b

    k1, k2, k3 = jax.random.split(key, 3)
    w1, b1 = linear(k1, int(output_size), HID)
    w2, b2 = linear(k2, HID, HID)
    w3, b3 = linear(k3, HID, 1)
    return {"w1": w1, "b1": b1, "w2": w2, "b2": b2, "w3": w3, "b3": b3}


def _reference_forward(inputs, params):
    """Pure-JAX f32 reference mirroring the PyTorch module."""
    h = inputs.reshape(inputs.shape[0], -1)
    h = h @ params["w1"] + params["b1"]
    h = jnp.where(h > 0, h, 0.01 * h)
    h = h @ params["w2"] + params["b2"]
    h = jnp.where(h > 0, h, 0.01 * h)
    h = h @ params["w3"] + params["b3"]
    return jax.nn.sigmoid(h)


if __name__ == "__main__":
    key = jax.random.PRNGKey(0)
    k_in, k_par = jax.random.split(key)

    # Small shapes: batch=2, input tensor (2, 4, 16) -> flattened D = 64.
    B, C, T = 2, 4, 16
    output_size = C * T
    inputs = jax.random.normal(k_in, (B, C, T), jnp.float32)
    params = init_params(k_par, output_size)

    validity = discriminator_forward(inputs, params)
    validity = jax.block_until_ready(validity)

    expected = _reference_forward(inputs, params)

    assert validity.shape == (B, 1)
    assert bool(jnp.all((validity >= 0.0) & (validity <= 1.0)))
    max_err = float(jnp.max(jnp.abs(validity - expected)))
    assert max_err < 2e-2, f"max abs err vs f32 reference: {max_err}"
    print("KERNEL_OK")
</pallas_src>

<mosaic_0001>
module attributes {stable_mosaic.version = 11 : i64} {
  func.func @_discriminator_kernel(%arg0: i32, %arg1: memref<128x64xf32, #tpu.memory_space<vmem>>, %arg2: memref<64x128xbf16, #tpu.memory_space<vmem>>, %arg3: memref<1x128xf32, #tpu.memory_space<vmem>>, %arg4: memref<128x128xbf16, #tpu.memory_space<vmem>>, %arg5: memref<1x128xf32, #tpu.memory_space<vmem>>, %arg6: memref<128x128xbf16, #tpu.memory_space<vmem>>, %arg7: memref<1x128xf32, #tpu.memory_space<vmem>>, %arg8: memref<1x128xf32, #tpu.memory_space<vmem>>) attributes {dimension_semantics = [#tpu.dimension_semantics<parallel>], iteration_bounds = array<i64: 1>, scalar_prefetch = 0 : i64, scratch_operands = 0 : i64, tpu.core_type = #tpu.core_type<tc>, window_params = [{transform_indices = @transform_0, window_bounds = array<i64: 128, 64>}, {pipeline_mode = #tpu.pipeline_mode<synchronous>, transform_indices = @transform_1, window_bounds = array<i64: 64, 128>}, {pipeline_mode = #tpu.pipeline_mode<synchronous>, transform_indices = @transform_2, window_bounds = array<i64: 1, 128>}, {pipeline_mode = #tpu.pipeline_mode<synchronous>, transform_indices = @transform_3, window_bounds = array<i64: 128, 128>}, {pipeline_mode = #tpu.pipeline_mode<synchronous>, transform_indices = @transform_4, window_bounds = array<i64: 1, 128>}, {pipeline_mode = #tpu.pipeline_mode<synchronous>, transform_indices = @transform_5, window_bounds = array<i64: 128, 128>}, {pipeline_mode = #tpu.pipeline_mode<synchronous>, transform_indices = @transform_6, window_bounds = array<i64: 1, 128>}, {transform_indices = @transform_7, window_bounds = array<i64: 1, 128>}]} {
    %c0 = arith.constant 0 : index
    %c0_0 = arith.constant 0 : index
    %0 = vector.load %arg1[%c0, %c0_0] : memref<128x64xf32, #tpu.memory_space<vmem>>, vector<128x64xf32>
    %1 = arith.truncf %0 : vector<128x64xf32> to vector<128x64xbf16>
    %c0_1 = arith.constant 0 : index
    %c0_2 = arith.constant 0 : index
    %2 = vector.load %arg2[%c0_1, %c0_2] : memref<64x128xbf16, #tpu.memory_space<vmem>>, vector<64x128xbf16>
    %cst = arith.constant dense<0.000000e+00> : vector<128x128xf32>
    %3 = tpu.matmul %1, %2, %cst {dimension_numbers = #tpu.dot_dimension_numbers<[1], [0], [0], [1], [0, 0, 1, 1], [], []>} : vector<128x64xbf16>, vector<64x128xbf16>, vector<128x128xf32> -> vector<128x128xf32>
    %c0_3 = arith.constant 0 : index
    %c0_4 = arith.constant 0 : index
    %4 = vector.load %arg3[%c0_3, %c0_4] : memref<1x128xf32, #tpu.memory_space<vmem>>, vector<1x128xf32>
    %5 = vector.broadcast %4 : vector<1x128xf32> to vector<128x128xf32>
    %6 = arith.addf %3, %5 : vector<128x128xf32>
    %cst_5 = arith.constant 0.000000e+00 : f32
    %7 = vector.broadcast %cst_5 : f32 to vector<128x128xf32>
    %8 = arith.cmpf ogt, %6, %7 : vector<128x128xf32>
    %cst_6 = arith.constant 0.00999999977 : f32
    %9 = vector.broadcast %cst_6 : f32 to vector<128x128xf32>
    %10 = arith.mulf %9, %6 : vector<128x128xf32>
    %11 = arith.select %8, %6, %10 : vector<128x128xi1>, vector<128x128xf32>
    %12 = arith.truncf %11 : vector<128x128xf32> to vector<128x128xbf16>
    %c0_7 = arith.constant 0 : index
    %c0_8 = arith.constant 0 : index
    %13 = vector.load %arg4[%c0_7, %c0_8] : memref<128x128xbf16, #tpu.memory_space<vmem>>, vector<128x128xbf16>
    %cst_9 = arith.constant dense<0.000000e+00> : vector<128x128xf32>
    %14 = tpu.matmul %12, %13, %cst_9 {dimension_numbers = #tpu.dot_dimension_numbers<[1], [0], [0], [1], [0, 0, 1, 1], [], []>} : vector<128x128xbf16>, vector<128x128xbf16>, vector<128x128xf32> -> vector<128x128xf32>
    %c0_10 = arith.constant 0 : index
    %c0_11 = arith.constant 0 : index
    %15 = vector.load %arg5[%c0_10, %c0_11] : memref<1x128xf32, #tpu.memory_space<vmem>>, vector<1x128xf32>
    %16 = vector.broadcast %15 : vector<1x128xf32> to vector<128x128xf32>
    %17 = arith.addf %14, %16 : vector<128x128xf32>
    %cst_12 = arith.constant 0.000000e+00 : f32
    %18 = vector.broadcast %cst_12 : f32 to vector<128x128xf32>
    %19 = arith.cmpf ogt, %17, %18 : vector<128x128xf32>
    %cst_13 = arith.constant 0.00999999977 : f32
    %20 = vector.broadcast %cst_13 : f32 to vector<128x128xf32>
    %21 = arith.mulf %20, %17 : vector<128x128xf32>
    %22 = arith.select %19, %17, %21 : vector<128x128xi1>, vector<128x128xf32>
    %23 = arith.truncf %22 : vector<128x128xf32> to vector<128x128xbf16>
    %c0_14 = arith.constant 0 : index
    %c0_15 = arith.constant 0 : index
    %24 = vector.load %arg6[%c0_14, %c0_15] : memref<128x128xbf16, #tpu.memory_space<vmem>>, vector<128x128xbf16>
    %cst_16 = arith.constant dense<0.000000e+00> : vector<128x128xf32>
    %25 = tpu.matmul %23, %24, %cst_16 {dimension_numbers = #tpu.dot_dimension_numbers<[1], [0], [0], [1], [0, 0, 1, 1], [], []>} : vector<128x128xbf16>, vector<128x128xbf16>, vector<128x128xf32> -> vector<128x128xf32>
    %c0_17 = arith.constant 0 : index
    %c0_18 = arith.constant 0 : index
    %26 = vector.load %arg7[%c0_17, %c0_18] : memref<1x128xf32, #tpu.memory_space<vmem>>, vector<1x128xf32>
    %27 = vector.broadcast %26 : vector<1x128xf32> to vector<128x128xf32>
    %28 = arith.addf %25, %27 : vector<128x128xf32>
    %29 = tpu.transpose %28, [1, 0] : vector<128x128xf32> -> vector<128x128xf32>
    %30 = vector.extract_strided_slice %29 {offsets = [0, 0], sizes = [1, 128], strides = [1, 1]} : vector<128x128xf32> to vector<1x128xf32>
    %cst_19 = arith.constant 0.000000e+00 : f32
    %31 = vector.broadcast %cst_19 : f32 to vector<1x128xf32>
    %32 = arith.subf %31, %30 : vector<1x128xf32>
    %33 = math.exp %32 : vector<1x128xf32>
    %cst_20 = arith.constant 1.000000e+00 : f32
    %34 = vector.broadcast %cst_20 : f32 to vector<1x128xf32>
    %35 = arith.addf %34, %33 : vector<1x128xf32>
    %36 = tpu.reciprocal %35 : vector<1x128xf32> -> vector<1x128xf32>
    %c0_21 = arith.constant 0 : index
    %c0_22 = arith.constant 0 : index
    %37 = vector.load %arg8[%c0_21, %c0_22] : memref<1x128xf32, #tpu.memory_space<vmem>>, vector<1x128xf32>
    tpu.vector_store %arg8[%c0_21, %c0_22], %36 {strides = array<i32>} : memref<1x128xf32, #tpu.memory_space<vmem>>, vector<1x128xf32>,
    return
  }
  func.func @transform_0(%arg0: i32) -> (i32, i32) {
    %c0_i32 = arith.constant 0 : i32
    %c0_i32_0 = arith.constant 0 : i32
    return %arg0, %c0_i32 : i32, i32
  }
  func.func @transform_1(%arg0: i32) -> (i32, i32) {
    %c0_i32 = arith.constant 0 : i32
    %c0_i32_0 = arith.constant 0 : i32
    %c0_i32_1 = arith.constant 0 : i32
    return %c0_i32, %c0_i32_0 : i32, i32
  }
  func.func @transform_2(%arg0: i32) -> (i32, i32) {
    %c0_i32 = arith.constant 0 : i32
    %c0_i32_0 = arith.constant 0 : i32
    %c0_i32_1 = arith.constant 0 : i32
    return %c0_i32, %c0_i32_0 : i32, i32
  }
  func.func @transform_3(%arg0: i32) -> (i32, i32) {
    %c0_i32 = arith.constant 0 : i32
    %c0_i32_0 = arith.constant 0 : i32
    %c0_i32_1 = arith.constant 0 : i32
    return %c0_i32, %c0_i32_0 : i32, i32
  }
  func.func @transform_4(%arg0: i32) -> (i32, i32) {
    %c0_i32 = arith.constant 0 : i32
    %c0_i32_0 = arith.constant 0 : i32
    %c0_i32_1 = arith.constant 0 : i32
    return %c0_i32, %c0_i32_0 : i32, i32
  }
  func.func @transform_5(%arg0: i32) -> (i32, i32) {
    %c0_i32 = arith.constant 0 : i32
    %c0_i32_0 = arith.constant 0 : i32
    %c0_i32_1 = arith.constant 0 : i32
    return %c0_i32, %c0_i32_0 : i32, i32
  }
  func.func @transform_6(%arg0: i32) -> (i32, i32) {
    %c0_i32 = arith.constant 0 : i32
    %c0_i32_0 = arith.constant 0 : i32
    %c0_i32_1 = arith.constant 0 : i32
    return %c0_i32, %c0_i32_0 : i32, i32
  }
  func.func @transform_7(%arg0: i32) -> (i32, i32) {
    %c0_i32 = arith.constant 0 : i32
    %c0_i32_0 = arith.constant 0 : i32
    return %c0_i32, %arg0 : i32, i32
  }
}

</mosaic_0001>

<llo_original>
// kernel: tpu_custom_call.1
$region0: #{tpu_custom_call.1}
  #allocation0 [shape = 'u32[]', space=smem, size = 0x4, offset = 0x4, fixed_abs, tag = 'smem constant byte address 0x4 - core index']
  #allocation1 [shape = 'u32[144,128]{1,0:T(1,128)}', space=vmem, size = 0x12000, scoped, tag = 'internal scratch']
  %s0 = inlined_call_operand.vmem [shape: f32[128,64], index: 0, kind: input, shape index: {}]
  %s1 = inlined_call_operand.vmem [shape: bf16[64,128], index: 1, kind: input, shape index: {}]
  %s2 = inlined_call_operand.vmem [shape: f32[1,128], index: 2, kind: input, shape index: {}]
  %s3 = inlined_call_operand.vmem [shape: bf16[128,128], index: 3, kind: input, shape index: {}]
  %s4 = inlined_call_operand.vmem [shape: f32[1,128], index: 4, kind: input, shape index: {}]
  %s5 = inlined_call_operand.vmem [shape: bf16[128,128], index: 5, kind: input, shape index: {}]
  %s6 = inlined_call_operand.vmem [shape: f32[1,128], index: 6, kind: input, shape index: {}]
  %s7 = inlined_call_operand.hbm [shape: f32[1,128], index: 7, kind: output, shape index: {}]
  %s8 = sld [smem:[#allocation0]]
  $region38: #{tpu_custom_call.1} parent=0
    _
  %s10 = ssub.s32 1, %s8
  %s11 = scalar_select 0, %s10, %s8
  $region1: #{tpu_custom_call.1} parent=0
    #allocation2 [shape = 'u8[512]{0}', space=vmem, size = 0x400, scoped, tag = 'output window, operand 0, single buffered']
    #allocation3 [shape = 's32[1]{0}', space=sflag, size = 0x4, scoped, tag = 'scoped memory for tpu_custom_call.1']
    %12 = vsyncpa [#allocation3], 0
    // Predicated region
    $region2: #{tpu_custom_call.1} parent=1 // pred_check
      _
    $region3: #{tpu_custom_call.1} parent=1 // pred_check_branch
      %14 = sbr.rel (0) target = $region5
    $region4: #{tpu_custom_call.1} parent=1 // pred_region
      _
    $region5: #{tpu_custom_call.1} parent=1 // pred_fallthru
      _
    // Predicated region
    $region6: #{tpu_custom_call.1} parent=1 // pred_check
      _
    $region7: #{tpu_custom_call.1} parent=1 // pred_check_branch
      %16 = sbr.rel (0) target = $region9
    $region8: #{tpu_custom_call.1} parent=1 // pred_region
      _
    $region9: #{tpu_custom_call.1} parent=1 // pred_fallthru
      _
    // Predicated region
    $region10: #{tpu_custom_call.1} parent=1 // pred_check
      _
    $region11: #{tpu_custom_call.1} parent=1 // pred_check_branch
      %18 = sbr.rel (0) target = $region13
    $region12: #{tpu_custom_call.1} parent=1 // pred_region
      _
    $region13: #{tpu_custom_call.1} parent=1 // pred_fallthru
      _
    // Predicated region
    $region14: #{tpu_custom_call.1} parent=1 // pred_check
      _
    $region15: #{tpu_custom_call.1} parent=1 // pred_check_branch
      %20 = sbr.rel (0) target = $region17
    $region16: #{tpu_custom_call.1} parent=1 // pred_region
      _
    $region17: #{tpu_custom_call.1} parent=1 // pred_fallthru
      _
    // Predicated region
    $region18: #{tpu_custom_call.1} parent=1 // pred_check
      _
    $region19: #{tpu_custom_call.1} parent=1 // pred_check_branch
      %22 = sbr.rel (0) target = $region21
    $region20: #{tpu_custom_call.1} parent=1 // pred_region
      _
    $region21: #{tpu_custom_call.1} parent=1 // pred_fallthru
      _
    // Predicated region
    $region22: #{tpu_custom_call.1} parent=1 // pred_check
      _
    $region23: #{tpu_custom_call.1} parent=1 // pred_check_branch
      %24 = sbr.rel (0) target = $region25
    $region24: #{tpu_custom_call.1} parent=1 // pred_region
      _
    $region25: #{tpu_custom_call.1} parent=1 // pred_fallthru
      _
    // Predicated region
    $region26: #{tpu_custom_call.1} parent=1 // pred_check
      _
    $region27: #{tpu_custom_call.1} parent=1 // pred_check_branch
      %26 = sbr.rel (0) target = $region29
    $region28: #{tpu_custom_call.1} parent=1 // pred_region
      _
    $region29: #{tpu_custom_call.1} parent=1 // pred_fallthru
      _
    %v28 = vld [vmem:[%s0] sm:$0xff]
    %v29 = vld [vmem:[%s0 + $0x8] sm:$0xff]
    %v30 = vld [vmem:[%s0 + $0x10] sm:$0xff]
    %v31 = vld [vmem:[%s0 + $0x18] sm:$0xff]
    %v32 = vld [vmem:[%s0 + $0x20] sm:$0xff]
    %v33 = vld [vmem:[%s0 + $0x28] sm:$0xff]
    %v34 = vld [vmem:[%s0 + $0x30] sm:$0xff]
    %v35 = vld [vmem:[%s0 + $0x38] sm:$0xff]
    %v36 = vld [vmem:[%s0 + $0x40] sm:$0xff]
    %v37 = vld [vmem:[%s0 + $0x48] sm:$0xff]
    %v38 = vld [vmem:[%s0 + $0x50] sm:$0xff]
    %v39 = vld [vmem:[%s0 + $0x58] sm:$0xff]
    %v40 = vld [vmem:[%s0 + $0x60] sm:$0xff]
    %v41 = vld [vmem:[%s0 + $0x68] sm:$0xff]
    %v42 = vld [vmem:[%s0 + $0x70] sm:$0xff]
    %v43 = vld [vmem:[%s0 + $0x78] sm:$0xff]
    %v44 = vpack.c.bf16 %v29, %v28
    %v45 = vpack.c.bf16 %v31, %v30
    %v46 = vpack.c.bf16 %v33, %v32
    %v47 = vpack.c.bf16 %v35, %v34
    %v48 = vpack.c.bf16 %v37, %v36
    %v49 = vpack.c.bf16 %v39, %v38
    %v50 = vpack.c.bf16 %v41, %v40
    %v51 = vpack.c.bf16 %v43, %v42
    %v52 = vld [vmem:[%s1] sm:$0xf]
    %v53 = vld [vmem:[%s1 + $0x4] sm:$0xf]
    %v54 = vld [vmem:[%s1 + $0x8] sm:$0xf]
    %v55 = vld [vmem:[%s1 + $0xc] sm:$0xf]
    %v56 = vld [vmem:[%s1 + $0x10] sm:$0xf]
    %v57 = vld [vmem:[%s1 + $0x14] sm:$0xf]
    %v58 = vld [vmem:[%s1 + $0x18] sm:$0xf]
    %v59 = vld [vmem:[%s1 + $0x1c] sm:$0xf]
    %v60 = vld [vmem:[%s2] sm:$0x1]
    %v62 = vlaneseq
    %v63 = vshrl.u32 %v62, 7
    %v64 = vsub.s32 0, %v63
    %v65 = vrot.slane %v60, %v64
    %v75 = vunpack.c.l.b16 %v52
    %v76 = vunpack.c.l.b16 %v53
    %v77 = vunpack.c.l.b16 %v54
    %v78 = vunpack.c.l.b16 %v55
    %v79 = vunpack.c.l.b16 %v56
    %v80 = vunpack.c.l.b16 %v57
    %v81 = vunpack.c.l.b16 %v58
    %v82 = vunpack.c.l.b16 %v59
    %v83 = vpack.c.b16 %v76, %v75
    %v84 = vpack.c.b16 %v78, %v77
    %v85 = vpack.c.b16 %v80, %v79
    %v86 = vpack.c.b16 %v82, %v81
    %vm91 = vcmask 523264
    %v93 = vsel %vm91, %v44, 0
    %v96 = vsel %vm91, %v45, 0
    %v99 = vsel %vm91, %v46, 0
    %v102 = vsel %vm91, %v47, 0
    %v105 = vsel %vm91, %v48, 0
    %v108 = vsel %vm91, %v49, 0
    %v111 = vsel %vm91, %v50, 0
    %v114 = vsel %vm91, %v51, 0
    %116 = vmatprep.subr.bf16.mxu0 0
    %117 = vmatpush1.bf16.msra.mxu0 0
    %118 = vmatprep.subr.bf16.mxu0 0
    %119 = vmatpush1.bf16.msra.mxu0 0
    %120 = vmatprep.subr.bf16.mxu0 0
    %121 = vmatpush1.bf16.msra.mxu0 0
    %122 = vmatprep.subr.bf16.mxu0 0
    %123 = vmatpush1.bf16.msra.mxu0 0
    %124 = vmatprep.subr.bf16.mxu0 0
    %125 = vmatpush1.bf16.msra.mxu0 %v86
    %126 = vmatprep.subr.bf16.mxu0 0
    %127 = vmatpush1.bf16.msra.mxu0 %v85
    %128 = vmatprep.subr.bf16.mxu0 0
    %129 = vmatpush1.bf16.msra.mxu0 %v84
    %130 = vmatprep.subr.bf16.mxu0 0
    %131 = vmatpush1.bf16.msra.mxu0 %v83
    %132 = vmatprep.subr.bf16.mxu0 0
    %133 = vmatpush2.bf16.msra.mxu0 0
    %134 = vmatprep.subr.bf16.mxu0 0
    %135 = vmatpush2.bf16.msra.mxu0 0
    %136 = vmatprep.subr.bf16.mxu0 0
    %137 = vmatpush2.bf16.msra.mxu0 0
    %138 = vmatprep.subr.bf16.mxu0 0
    %139 = vmatpush2.bf16.msra.mxu0 0
    %140 = vmatprep.subr.bf16.mxu0 0
    %141 = vmatpush2.bf16.msra.mxu0 0
    %142 = vmatprep.subr.bf16.mxu0 0
    %143 = vmatpush2.bf16.msra.mxu0 0
    %144 = vmatprep.subr.bf16.mxu0 0
    %145 = vmatpush2.bf16.msra.mxu0 0
    %146 = vmatprep.subr.bf16.mxu0 0
    %147 = vmatpush2.bf16.msra.mxu0 0
    %148 = vmatprep.mubr.bf16.mxu0 0
    %149 = vmatmul.mubr.bf16.gmra.mxu0 %v93
    %v150 = vpop.f32.mrf.mxu0
    %v151 = vadd.f32 %v65, %v150
    %v152 = vpop.f32.mrf.mxu0
    %v153 = vpop.f32.mrf.mxu0
    %v154 = vadd.f32 %v65, %v153
    %v155 = vpop.f32.mrf.mxu0
    %156 = vmatprep.mubr.bf16.mxu0 0
    %157 = vmatmul.mubr.bf16.gmra.mxu0 %v96
    %v158 = vpop.f32.mrf.mxu0
    %v159 = vadd.f32 %v65, %v158
    %v160 = vpop.f32.mrf.mxu0
    %v161 = vpop.f32.mrf.mxu0
    %v162 = vadd.f32 %v65, %v161
    %v163 = vpop.f32.mrf.mxu0
    %164 = vmatprep.mubr.bf16.mxu0 0
    %165 = vmatmul.mubr.bf16.gmra.mxu0 %v99
    %v166 = vpop.f32.mrf.mxu0
    %v167 = vadd.f32 %v65, %v166
    %v168 = vpop.f32.mrf.mxu0
    %v169 = vpop.f32.mrf.mxu0
    %v170 = vadd.f32 %v65, %v169
    %v171 = vpop.f32.mrf.mxu0
    %172 = vmatprep.mubr.bf16.mxu0 0
    %173 = vmatmul.mubr.bf16.gmra.mxu0 %v102
    %v174 = vpop.f32.mrf.mxu0
    %v175 = vadd.f32 %v65, %v174
    %v176 = vpop.f32.mrf.mxu0
    %v177 = vpop.f32.mrf.mxu0
    %v178 = vadd.f32 %v65, %v177
    %v179 = vpop.f32.mrf.mxu0
    %180 = vmatprep.mubr.bf16.mxu0 0
    %181 = vmatmul.mubr.bf16.gmra.mxu0 %v105
    %v182 = vpop.f32.mrf.mxu0
    %v183 = vadd.f32 %v65, %v182
    %v184 = vpop.f32.mrf.mxu0
    %v185 = vpop.f32.mrf.mxu0
    %v186 = vadd.f32 %v65, %v185
    %v187 = vpop.f32.mrf.mxu0
    %188 = vmatprep.mubr.bf16.mxu0 0
    %189 = vmatmul.mubr.bf16.gmra.mxu0 %v108
    %v190 = vpop.f32.mrf.mxu0
    %v191 = vadd.f32 %v65, %v190
    %v192 = vpop.f32.mrf.mxu0
    %v193 = vpop.f32.mrf.mxu0
    %v194 = vadd.f32 %v65, %v193
    %v195 = vpop.f32.mrf.mxu0
    %196 = vmatprep.mubr.bf16.mxu0 0
    %197 = vmatmul.mubr.bf16.gmra.mxu0 %v111
    %v198 = vpop.f32.mrf.mxu0
    %v199 = vadd.f32 %v65, %v198
    %v200 = vpop.f32.mrf.mxu0
    %v201 = vpop.f32.mrf.mxu0
    %v202 = vadd.f32 %v65, %v201
    %v203 = vpop.f32.mrf.mxu0
    %204 = vmatprep.mubr.bf16.mxu0 0
    %205 = vmatmul.mubr.bf16.gmra.mxu0 %v114
    %v206 = vpop.f32.mrf.mxu0
    %v207 = vadd.f32 %v65, %v206
    %v208 = vpop.f32.mrf.mxu0
    %v209 = vpop.f32.mrf.mxu0
    %v210 = vadd.f32 %v65, %v209
    %v211 = vpop.f32.mrf.mxu0
    %212 = vdwg.mxu0
    %vm213 = vcmp.gt.f32.partialorder %v151, 0.0
    %vm214 = vcmp.gt.f32.partialorder %v154, 0.0
    %vm215 = vcmp.gt.f32.partialorder %v159, 0.0
    %vm216 = vcmp.gt.f32.partialorder %v162, 0.0
    %vm217 = vcmp.gt.f32.partialorder %v167, 0.0
    %vm218 = vcmp.gt.f32.partialorder %v170, 0.0
    %vm219 = vcmp.gt.f32.partialorder %v175, 0.0
    %vm220 = vcmp.gt.f32.partialorder %v178, 0.0
    %vm221 = vcmp.gt.f32.partialorder %v183, 0.0
    %vm222 = vcmp.gt.f32.partialorder %v186, 0.0
    %vm223 = vcmp.gt.f32.partialorder %v191, 0.0
    %vm224 = vcmp.gt.f32.partialorder %v194, 0.0
    %vm225 = vcmp.gt.f32.partialorder %v199, 0.0
    %vm226 = vcmp.gt.f32.partialorder %v202, 0.0
    %vm227 = vcmp.gt.f32.partialorder %v207, 0.0
    %vm228 = vcmp.gt.f32.partialorder %v210, 0.0
    %v229 = vmul.f32 %v151, 0.01
    %v230 = vmul.f32 %v154, 0.01
    %v231 = vmul.f32 %v159, 0.01
    %v232 = vmul.f32 %v162, 0.01
    %v233 = vmul.f32 %v167, 0.01
    %v234 = vmul.f32 %v170, 0.01
    %v235 = vmul.f32 %v175, 0.01
    %v236 = vmul.f32 %v178, 0.01
    %v237 = vmul.f32 %v183, 0.01
    %v238 = vmul.f32 %v186, 0.01
    %v239 = vmul.f32 %v191, 0.01
    %v240 = vmul.f32 %v194, 0.01
    %v241 = vmul.f32 %v199, 0.01
    %v242 = vmul.f32 %v202, 0.01
    %v243 = vmul.f32 %v207, 0.01
    %v244 = vmul.f32 %v210, 0.01
    %v245 = vsel %vm213, %v151, %v229
    %v246 = vsel %vm214, %v154, %v230
    %v247 = vsel %vm215, %v159, %v231
    %v248 = vsel %vm216, %v162, %v232
    %v249 = vsel %vm217, %v167, %v233
    %v250 = vsel %vm218, %v170, %v234
    %v251 = vsel %vm219, %v175, %v235
    %v252 = vsel %vm220, %v178, %v236
    %v253 = vsel %vm221, %v183, %v237
    %v254 = vsel %vm222, %v186, %v238
    %v255 = vsel %vm223, %v191, %v239
    %v256 = vsel %vm224, %v194, %v240
    %v257 = vsel %vm225, %v199, %v241
    %v258 = vsel %vm226, %v202, %v242
    %v259 = vsel %vm227, %v207, %v243
    %v260 = vsel %vm228, %v210, %v244
    %v261 = vpack.c.bf16 %v246, %v245
    %v262 = vpack.c.bf16 %v248, %v247
    %v263 = vpack.c.bf16 %v250, %v249
    %v264 = vpack.c.bf16 %v252, %v251
    %v265 = vpack.c.bf16 %v254, %v253
    %v266 = vpack.c.bf16 %v256, %v255
    %v267 = vpack.c.bf16 %v258, %v257
    %v268 = vpack.c.bf16 %v260, %v259
    %v269 = vld [vmem:[%s3] sm:$0xf]
    %v270 = vld [vmem:[%s3 + $0x4] sm:$0xf]
    %v271 = vld [vmem:[%s3 + $0x8] sm:$0xf]
    %v272 = vld [vmem:[%s3 + $0xc] sm:$0xf]
    %v273 = vld [vmem:[%s3 + $0x10] sm:$0xf]
    %v274 = vld [vmem:[%s3 + $0x14] sm:$0xf]
    %v275 = vld [vmem:[%s3 + $0x18] sm:$0xf]
    %v276 = vld [vmem:[%s3 + $0x1c] sm:$0xf]
    %v277 = vld [vmem:[%s3 + $0x20] sm:$0xf]
    %v278 = vld [vmem:[%s3 + $0x24] sm:$0xf]
    %v279 = vld [vmem:[%s3 + $0x28] sm:$0xf]
    %v280 = vld [vmem:[%s3 + $0x2c] sm:$0xf]
    %v281 = vld [vmem:[%s3 + $0x30] sm:$0xf]
    %v282 = vld [vmem:[%s3 + $0x34] sm:$0xf]
    %v283 = vld [vmem:[%s3 + $0x38] sm:$0xf]
    %v284 = vld [vmem:[%s3 + $0x3c] sm:$0xf]
    %v285 = vld [vmem:[%s4] sm:$0x1]
    %v287 = vlaneseq
    %v288 = vshrl.u32 %v287, 7
    %v289 = vsub.s32 0, %v288
    %v290 = vrot.slane %v285, %v289
    %v308 = vunpack.c.l.b16 %v269
    %v309 = vunpack.c.l.b16 %v270
    %v310 = vunpack.c.l.b16 %v271
    %v311 = vunpack.c.l.b16 %v272
    %v312 = vunpack.c.l.b16 %v273
    %v313 = vunpack.c.l.b16 %v274
    %v314 = vunpack.c.l.b16 %v275
    %v315 = vunpack.c.l.b16 %v276
    %v316 = vunpack.c.l.b16 %v277
    %v317 = vunpack.c.l.b16 %v278
    %v318 = vunpack.c.l.b16 %v279
    %v319 = vunpack.c.l.b16 %v280
    %v320 = vunpack.c.l.b16 %v281
    %v321 = vunpack.c.l.b16 %v282
    %v322 = vunpack.c.l.b16 %v283
    %v323 = vunpack.c.l.b16 %v284
    %v324 = vpack.c.b16 %v309, %v308
    %v325 = vpack.c.b16 %v311, %v310
    %v326 = vpack.c.b16 %v313, %v312
    %v327 = vpack.c.b16 %v315, %v314
    %v328 = vpack.c.b16 %v317, %v316
    %v329 = vpack.c.b16 %v319, %v318
    %v330 = vpack.c.b16 %v321, %v320
    %v331 = vpack.c.b16 %v323, %v322
    %340 = vmatprep.subr.bf16.mxu0 0
    %341 = vmatpush1.bf16.msra.mxu0 %v331
    %342 = vmatprep.subr.bf16.mxu0 0
    %343 = vmatpush1.bf16.msra.mxu0 %v330
    %344 = vmatprep.subr.bf16.mxu0 0
    %345 = vmatpush1.bf16.msra.mxu0 %v329
    %346 = vmatprep.subr.bf16.mxu0 0
    %347 = vmatpush1.bf16.msra.mxu0 %v328
    %348 = vmatprep.subr.bf16.mxu0 0
    %349 = vmatpush1.bf16.msra.mxu0 %v327
    %350 = vmatprep.subr.bf16.mxu0 0
    %351 = vmatpush1.bf16.msra.mxu0 %v326
    %352 = vmatprep.subr.bf16.mxu0 0
    %353 = vmatpush1.bf16.msra.mxu0 %v325
    %354 = vmatprep.subr.bf16.mxu0 0
    %355 = vmatpush1.bf16.msra.mxu0 %v324
    %356 = vmatprep.subr.bf16.mxu0 0
    %357 = vmatpush2.bf16.msra.mxu0 0
    %358 = vmatprep.subr.bf16.mxu0 0
    %359 = vmatpush2.bf16.msra.mxu0 0
    %360 = vmatprep.subr.bf16.mxu0 0
    %361 = vmatpush2.bf16.msra.mxu0 0
    %362 = vmatprep.subr.bf16.mxu0 0
    %363 = vmatpush2.bf16.msra.mxu0 0
    %364 = vmatprep.subr.bf16.mxu0 0
    %365 = vmatpush2.bf16.msra.mxu0 0
    %366 = vmatprep.subr.bf16.mxu0 0
    %367 = vmatpush2.bf16.msra.mxu0 0
    %368 = vmatprep.subr.bf16.mxu0 0
    %369 = vmatpush2.bf16.msra.mxu0 0
    %370 = vmatprep.subr.bf16.mxu0 0
    %371 = vmatpush2.bf16.msra.mxu0 0
    %372 = vmatprep.mubr.bf16.mxu0 0
    %373 = vmatmul.mubr.bf16.gmra.mxu0 %v261
    %v374 = vpop.f32.mrf.mxu0
    %v375 = vadd.f32 %v290, %v374
    %v376 = vpop.f32.mrf.mxu0
    %v377 = vpop.f32.mrf.mxu0
    %v378 = vadd.f32 %v290, %v377
    %v379 = vpop.f32.mrf.mxu0
    %380 = vmatprep.mubr.bf16.mxu0 0
    %381 = vmatmul.mubr.bf16.gmra.mxu0 %v262
    %v382 = vpop.f32.mrf.mxu0
    %v383 = vadd.f32 %v290, %v382
    %v384 = vpop.f32.mrf.mxu0
    %v385 = vpop.f32.mrf.mxu0
    %v386 = vadd.f32 %v290, %v385
    %v387 = vpop.f32.mrf.mxu0
    %388 = vmatprep.mubr.bf16.mxu0 0
    %389 = vmatmul.mubr.bf16.gmra.mxu0 %v263
    %v390 = vpop.f32.mrf.mxu0
    %v391 = vadd.f32 %v290, %v390
    %v392 = vpop.f32.mrf.mxu0
    %v393 = vpop.f32.mrf.mxu0
    %v394 = vadd.f32 %v290, %v393
    %v395 = vpop.f32.mrf.mxu0
    %396 = vmatprep.mubr.bf16.mxu0 0
    %397 = vmatmul.mubr.bf16.gmra.mxu0 %v264
    %v398 = vpop.f32.mrf.mxu0
    %v399 = vadd.f32 %v290, %v398
    %v400 = vpop.f32.mrf.mxu0
    %v401 = vpop.f32.mrf.mxu0
    %v402 = vadd.f32 %v290, %v401
    %v403 = vpop.f32.mrf.mxu0
    %404 = vmatprep.mubr.bf16.mxu0 0
    %405 = vmatmul.mubr.bf16.gmra.mxu0 %v265
    %v406 = vpop.f32.mrf.mxu0
    %v407 = vadd.f32 %v290, %v406
    %v408 = vpop.f32.mrf.mxu0
    %v409 = vpop.f32.mrf.mxu0
    %v410 = vadd.f32 %v290, %v409
    %v411 = vpop.f32.mrf.mxu0
    %412 = vmatprep.mubr.bf16.mxu0 0
    %413 = vmatmul.mubr.bf16.gmra.mxu0 %v266
    %v414 = vpop.f32.mrf.mxu0
    %v415 = vadd.f32 %v290, %v414
    %v416 = vpop.f32.mrf.mxu0
    %v417 = vpop.f32.mrf.mxu0
    %v418 = vadd.f32 %v290, %v417
    %v419 = vpop.f32.mrf.mxu0
    %420 = vmatprep.mubr.bf16.mxu0 0
    %421 = vmatmul.mubr.bf16.gmra.mxu0 %v267
    %v422 = vpop.f32.mrf.mxu0
    %v423 = vadd.f32 %v290, %v422
    %v424 = vpop.f32.mrf.mxu0
    %v425 = vpop.f32.mrf.mxu0
    %v426 = vadd.f32 %v290, %v425
    %v427 = vpop.f32.mrf.mxu0
    %428 = vmatprep.mubr.bf16.mxu0 0
    %429 = vmatmul.mubr.bf16.gmra.mxu0 %v268
    %v430 = vpop.f32.mrf.mxu0
    %v431 = vadd.f32 %v290, %v430
    %v432 = vpop.f32.mrf.mxu0
    %v433 = vpop.f32.mrf.mxu0
    %v434 = vadd.f32 %v290, %v433
    %v435 = vpop.f32.mrf.mxu0
    %436 = vdwg.mxu0
    %vm437 = vcmp.gt.f32.partialorder %v375, 0.0
    %vm438 = vcmp.gt.f32.partialorder %v378, 0.0
    %vm439 = vcmp.gt.f32.partialorder %v383, 0.0
    %vm440 = vcmp.gt.f32.partialorder %v386, 0.0
    %vm441 = vcmp.gt.f32.partialorder %v391, 0.0
    %vm442 = vcmp.gt.f32.partialorder %v394, 0.0
    %vm443 = vcmp.gt.f32.partialorder %v399, 0.0
    %vm444 = vcmp.gt.f32.partialorder %v402, 0.0
    %vm445 = vcmp.gt.f32.partialorder %v407, 0.0
    %vm446 = vcmp.gt.f32.partialorder %v410, 0.0
    %vm447 = vcmp.gt.f32.partialorder %v415, 0.0
    %vm448 = vcmp.gt.f32.partialorder %v418, 0.0
    %vm449 = vcmp.gt.f32.partialorder %v423, 0.0
    %vm450 = vcmp.gt.f32.partialorder %v426, 0.0
    %vm451 = vcmp.gt.f32.partialorder %v431, 0.0
    %vm452 = vcmp.gt.f32.partialorder %v434, 0.0
    %v453 = vmul.f32 %v375, 0.01
    %v454 = vmul.f32 %v378, 0.01
    %v455 = vmul.f32 %v383, 0.01
    %v456 = vmul.f32 %v386, 0.01
    %v457 = vmul.f32 %v391, 0.01
    %v458 = vmul.f32 %v394, 0.01
    %v459 = vmul.f32 %v399, 0.01
    %v460 = vmul.f32 %v402, 0.01
    %v461 = vmul.f32 %v407, 0.01
    %v462 = vmul.f32 %v410, 0.01
    %v463 = vmul.f32 %v415, 0.01
    %v464 = vmul.f32 %v418, 0.01
    %v465 = vmul.f32 %v423, 0.01
    %v466 = vmul.f32 %v426, 0.01
    %v467 = vmul.f32 %v431, 0.01
    %v468 = vmul.f32 %v434, 0.01
    %v469 = vsel %vm437, %v375, %v453
    %v470 = vsel %vm438, %v378, %v454
    %v471 = vsel %vm439, %v383, %v455
    %v472 = vsel %vm440, %v386, %v456
    %v473 = vsel %vm441, %v391, %v457
    %v474 = vsel %vm442, %v394, %v458
    %v475 = vsel %vm443, %v399, %v459
    %v476 = vsel %vm444, %v402, %v460
    %v477 = vsel %vm445, %v407, %v461
    %v478 = vsel %vm446, %v410, %v462
    %v479 = vsel %vm447, %v415, %v463
    %v480 = vsel %vm448, %v418, %v464
    %v481 = vsel %vm449, %v423, %v465
    %v482 = vsel %vm450, %v426, %v466
    %v483 = vsel %vm451, %v431, %v467
    %v484 = vsel %vm452, %v434, %v468
    %v485 = vpack.c.bf16 %v470, %v469
    %v486 = vpack.c.bf16 %v472, %v471
    %v487 = vpack.c.bf16 %v474, %v473
    %v488 = vpack.c.bf16 %v476, %v475
    %v489 = vpack.c.bf16 %v478, %v477
    %v490 = vpack.c.bf16 %v480, %v479
    %v491 = vpack.c.bf16 %v482, %v481
    %v492 = vpack.c.bf16 %v484, %v483
    %v493 = vld [vmem:[%s5] sm:$0xf]
    %v494 = vld [vmem:[%s5 + $0x4] sm:$0xf]
    %v495 = vld [vmem:[%s5 + $0x8] sm:$0xf]
    %v496 = vld [vmem:[%s5 + $0xc] sm:$0xf]
    %v497 = vld [vmem:[%s5 + $0x10] sm:$0xf]
    %v498 = vld [vmem:[%s5 + $0x14] sm:$0xf]
    %v499 = vld [vmem:[%s5 + $0x18] sm:$0xf]
    %v500 = vld [vmem:[%s5 + $0x1c] sm:$0xf]
    %v501 = vld [vmem:[%s5 + $0x20] sm:$0xf]
    %v502 = vld [vmem:[%s5 + $0x24] sm:$0xf]
    %v503 = vld [vmem:[%s5 + $0x28] sm:$0xf]
    %v504 = vld [vmem:[%s5 + $0x2c] sm:$0xf]
    %v505 = vld [vmem:[%s5 + $0x30] sm:$0xf]
    %v506 = vld [vmem:[%s5 + $0x34] sm:$0xf]
    %v507 = vld [vmem:[%s5 + $0x38] sm:$0xf]
    %v508 = vld [vmem:[%s5 + $0x3c] sm:$0xf]
    %v509 = vld [vmem:[%s6] sm:$0x1]
    %v511 = vlaneseq
    %v512 = vshrl.u32 %v511, 7
    %v513 = vsub.s32 0, %v512
    %v514 = vrot.slane %v509, %v513
    %v532 = vunpack.c.l.b16 %v493
    %v533 = vunpack.c.l.b16 %v494
    %v534 = vunpack.c.l.b16 %v495
    %v535 = vunpack.c.l.b16 %v496
    %v536 = vunpack.c.l.b16 %v497
    %v537 = vunpack.c.l.b16 %v498
    %v538 = vunpack.c.l.b16 %v499
    %v539 = vunpack.c.l.b16 %v500
    %v540 = vunpack.c.l.b16 %v501
    %v541 = vunpack.c.l.b16 %v502
    %v542 = vunpack.c.l.b16 %v503
    %v543 = vunpack.c.l.b16 %v504
    %v544 = vunpack.c.l.b16 %v505
    %v545 = vunpack.c.l.b16 %v506
    %v546 = vunpack.c.l.b16 %v507
    %v547 = vunpack.c.l.b16 %v508
    %v548 = vpack.c.b16 %v533, %v532
    %v549 = vpack.c.b16 %v535, %v534
    %v550 = vpack.c.b16 %v537, %v536
    %v551 = vpack.c.b16 %v539, %v538
    %v552 = vpack.c.b16 %v541, %v540
    %v553 = vpack.c.b16 %v543, %v542
    %v554 = vpack.c.b16 %v545, %v544
    %v555 = vpack.c.b16 %v547, %v546
    %564 = vmatprep.subr.bf16.mxu0 0
    %565 = vmatpush1.bf16.msra.mxu0 %v555
    %566 = vmatprep.subr.bf16.mxu0 0
    %567 = vmatpush1.bf16.msra.mxu0 %v554
    %568 = vmatprep.subr.bf16.mxu0 0
    %569 = vmatpush1.bf16.msra.mxu0 %v553
    %570 = vmatprep.subr.bf16.mxu0 0
    %571 = vmatpush1.bf16.msra.mxu0 %v552
    %572 = vmatprep.subr.bf16.mxu0 0
    %573 = vmatpush1.bf16.msra.mxu0 %v551
    %574 = vmatprep.subr.bf16.mxu0 0
    %575 = vmatpush1.bf16.msra.mxu0 %v550
    %576 = vmatprep.subr.bf16.mxu0 0
    %577 = vmatpush1.bf16.msra.mxu0 %v549
    %578 = vmatprep.subr.bf16.mxu0 0
    %579 = vmatpush1.bf16.msra.mxu0 %v548
    %580 = vmatprep.subr.bf16.mxu0 0
    %581 = vmatpush2.bf16.msra.mxu0 0
    %582 = vmatprep.subr.bf16.mxu0 0
    %583 = vmatpush2.bf16.msra.mxu0 0
    %584 = vmatprep.subr.bf16.mxu0 0
    %585 = vmatpush2.bf16.msra.mxu0 0
    %586 = vmatprep.subr.bf16.mxu0 0
    %587 = vmatpush2.bf16.msra.mxu0 0
    %588 = vmatprep.subr.bf16.mxu0 0
    %589 = vmatpush2.bf16.msra.mxu0 0
    %590 = vmatprep.subr.bf16.mxu0 0
    %591 = vmatpush2.bf16.msra.mxu0 0
    %592 = vmatprep.subr.bf16.mxu0 0
    %593 = vmatpush2.bf16.msra.mxu0 0
    %594 = vmatprep.subr.bf16.mxu0 0
    %595 = vmatpush2.bf16.msra.mxu0 0
    %596 = vmatprep.mubr.bf16.mxu0 0
    %597 = vmatmul.mubr.bf16.gmra.mxu0 %v485
    %v598 = vpop.f32.mrf.mxu0
    %v599 = vadd.f32 %v514, %v598
    %v600 = vpop.f32.mrf.mxu0
    %v601 = vpop.f32.mrf.mxu0
    %v602 = vadd.f32 %v514, %v601
    %v603 = vpop.f32.mrf.mxu0
    %604 = vmatprep.mubr.bf16.mxu0 0
    %605 = vmatmul.mubr.bf16.gmra.mxu0 %v486
    %v606 = vpop.f32.mrf.mxu0
    %v607 = vadd.f32 %v514, %v606
    %v608 = vpop.f32.mrf.mxu0
    %v609 = vpop.f32.mrf.mxu0
    %v610 = vadd.f32 %v514, %v609
    %v611 = vpop.f32.mrf.mxu0
    %612 = vmatprep.mubr.bf16.mxu0 0
    %613 = vmatmul.mubr.bf16.gmra.mxu0 %v487
    %v614 = vpop.f32.mrf.mxu0
    %v615 = vadd.f32 %v514, %v614
    %v616 = vpop.f32.mrf.mxu0
    %v617 = vpop.f32.mrf.mxu0
    %v618 = vadd.f32 %v514, %v617
    %v619 = vpop.f32.mrf.mxu0
    %620 = vmatprep.mubr.bf16.mxu0 0
    %621 = vmatmul.mubr.bf16.gmra.mxu0 %v488
    %v622 = vpop.f32.mrf.mxu0
    %v623 = vadd.f32 %v514, %v622
    %v624 = vpop.f32.mrf.mxu0
    %v625 = vpop.f32.mrf.mxu0
    %v626 = vadd.f32 %v514, %v625
    %v627 = vpop.f32.mrf.mxu0
    %628 = vmatprep.mubr.bf16.mxu0 0
    %629 = vmatmul.mubr.bf16.gmra.mxu0 %v489
    %v630 = vpop.f32.mrf.mxu0
    %v631 = vadd.f32 %v514, %v630
    %v632 = vpop.f32.mrf.mxu0
    %v633 = vpop.f32.mrf.mxu0
    %v634 = vadd.f32 %v514, %v633
    %v635 = vpop.f32.mrf.mxu0
    %636 = vmatprep.mubr.bf16.mxu0 0
    %637 = vmatmul.mubr.bf16.gmra.mxu0 %v490
    %v638 = vpop.f32.mrf.mxu0
    %v639 = vadd.f32 %v514, %v638
    %v640 = vpop.f32.mrf.mxu0
    %v641 = vpop.f32.mrf.mxu0
    %v642 = vadd.f32 %v514, %v641
    %v643 = vpop.f32.mrf.mxu0
    %644 = vmatprep.mubr.bf16.mxu0 0
    %645 = vmatmul.mubr.bf16.gmra.mxu0 %v491
    %v646 = vpop.f32.mrf.mxu0
    %v647 = vadd.f32 %v514, %v646
    %v648 = vpop.f32.mrf.mxu0
    %v649 = vpop.f32.mrf.mxu0
    %v650 = vadd.f32 %v514, %v649
    %v651 = vpop.f32.mrf.mxu0
    %652 = vmatprep.mubr.bf16.mxu0 0
    %653 = vmatmul.mubr.bf16.gmra.mxu0 %v492
    %v654 = vpop.f32.mrf.mxu0
    %v655 = vadd.f32 %v514, %v654
    %v656 = vpop.f32.mrf.mxu0
    %v657 = vpop.f32.mrf.mxu0
    %v658 = vadd.f32 %v514, %v657
    %v659 = vpop.f32.mrf.mxu0
    %660 = vdwg.mxu0
    %661 = vxpose.xlu0.b32.start [1/16] %v599, 128
    %662 = vxpose.xlu0.b32.cont [2/16] %v602, 128
    %663 = vxpose.xlu0.b32.cont [3/16] %v607, 128
    %664 = vxpose.xlu0.b32.cont [4/16] %v610, 128
    %665 = vxpose.xlu0.b32.cont [5/16] %v615, 128
    %666 = vxpose.xlu0.b32.cont [6/16] %v618, 128
    %667 = vxpose.xlu0.b32.cont [7/16] %v623, 128
    %668 = vxpose.xlu0.b32.cont [8/16] %v626, 128
    %669 = vxpose.xlu0.b32.cont [9/16] %v631, 128
    %670 = vxpose.xlu0.b32.cont [10/16] %v634, 128
    %671 = vxpose.xlu0.b32.cont [11/16] %v639, 128
    %672 = vxpose.xlu0.b32.cont [12/16] %v642, 128
    %673 = vxpose.xlu0.b32.cont [13/16] %v647, 128
    %674 = vxpose.xlu0.b32.cont [14/16] %v650, 128
    %675 = vxpose.xlu0.b32.cont [15/16] %v655, 128
    %676 = vxpose.xlu0.b32.end [16/16] %v658, 128
    %v677 = vpop.trf.xlu0
    %v678 = vpop.trf.xlu0
    %v679 = vpop.trf.xlu0
    %v680 = vpop.trf.xlu0
    %v681 = vpop.trf.xlu0
    %v682 = vpop.trf.xlu0
    %v683 = vpop.trf.xlu0
    %v684 = vpop.trf.xlu0
    %v685 = vpop.trf.xlu0
    %v686 = vpop.trf.xlu0
    %v687 = vpop.trf.xlu0
    %v688 = vpop.trf.xlu0
    %v689 = vpop.trf.xlu0
    %v690 = vpop.trf.xlu0
    %v691 = vpop.trf.xlu0
    %v692 = vpop.trf.xlu0
    %v693 = vsub.f32 0.0, %v677
    %v694 = vmul.f32 %v693, 1.442695
    %v695 = vpow.pop %v694
    %v696 = vadd.f32 %v695, 1.0
    %v697 = vrcp.pop %v696
    %698 = vst [vmem:[#allocation2] sm:$0x1] %v697
    // Predicated region
    $region30: #{tpu_custom_call.1} parent=1 // pred_check
      _
    $region31: #{tpu_custom_call.1} parent=1 // pred_check_branch
      %700 = sbr.rel (0) target = $region33
    $region32: #{tpu_custom_call.1} parent=1 // pred_region
      %s702 = ssub.s32 16, 16
      %703 = vsyncadd [#allocation3], %s702
      %s705 = sshll.u32 [#allocation2], 4
      %s706 = int_to_ptr.vmem [resolvable:$true] %s705
      %708 = dma.vmem_to_hbm [thread:$0]  %s706, 16, %s7, [#allocation3]
    $region33: #{tpu_custom_call.1} parent=1 // pred_fallthru
      _
    // Predicated region
    $region34: #{tpu_custom_call.1} parent=1 // pred_check
      _
    $region35: #{tpu_custom_call.1} parent=1 // pred_check_branch
      %710 = sbr.rel (0) target = $region37
    $region36: #{tpu_custom_call.1} parent=1 // pred_region
      %711 = dma.done [#allocation3], 16
    $region37: #{tpu_custom_call.1} parent=1 // pred_fallthru
      _
    %712 = vsyncpa [#allocation3], 1

</llo_original>
